<compile_context>
chip_gen: v5e
topology: v5e:2x2
jax: 0.10.0
libtpu: 0.0.40
codegen_flags: <defaults>
</compile_context>

<pallas_src>
import functools

import jax
import jax.numpy as jnp
from jax.experimental import pallas as pl
from jax.experimental.pallas import tpu as pltpu


def _round_up(n, m):
    return ((n + m - 1) // m) * m


def _elementwise_dtype(compute_dtype):
    """bf16 VPU elementwise on v6e/v7x; f32 on older chips (no bf16 VALU)."""
    if jnp.dtype(compute_dtype) == jnp.dtype(jnp.float32):
        return jnp.float32
    try:
        kind = jax.devices()[0].device_kind.lower()
    except Exception:
        return jnp.float32
    if any(v in kind for v in ("v2", "v3", "v4", "v5")):
        return jnp.float32
    return compute_dtype


def _pick_ktile(in_pad):
    """Largest K tile in {512,256,128} dividing in_pad (in_pad % 128 == 0)."""
    if in_pad <= 512:
        return in_pad
    for cand in (512, 256, 128):
        if in_pad % cand == 0:
            return cand
    return in_pad


# ----------------------------------------------------------------------------
# Kernels
# ----------------------------------------------------------------------------
def _mlp_kernel(num_layers, ew_dtype, x_ref, *refs):
    """Fused MLP forward over one batch tile.

    refs = (w0_t, b0, ..., w{L-1}_t, b{L-1}, out_ref)
      wi_t : (in_pad_i, out_pad_i)  compute dtype (bf16/f32), whole-VMEM-resident
      bi   : (1, out_pad_i)         f32, whole-VMEM-resident
    """
    out_ref = refs[-1]
    wb = refs[:-1]
    h = x_ref[...]
    for i in range(num_layers):
        w_ref = wb[2 * i]
        b = wb[2 * i + 1][...]
        acc = jnp.dot(h.astype(w_ref.dtype), w_ref[...],
                      preferred_element_type=jnp.float32) + b
        if i < num_layers - 1:
            # ReLU in the elementwise dtype (bf16 on v6e/v7x, f32 on v5e);
            # dropout (eval mode) is the identity.
            h = jnp.maximum(acc.astype(ew_dtype), 0.0)
        else:
            h = acc
    out_ref[...] = h.astype(out_ref.dtype)


def _layer_ktiled_kernel(apply_relu, ew_dtype, x_ref, w_ref, b_ref, o_ref,
                         acc_ref):
    """One linear layer with a K-tiled grid and an f32 VMEM accumulator."""
    k = pl.program_id(1)

    @pl.when(k == 0)
    def _():
        acc_ref[...] = jnp.zeros_like(acc_ref)

    acc_ref[...] += jnp.dot(x_ref[...].astype(w_ref.dtype), w_ref[...],
                            preferred_element_type=jnp.float32)

    @pl.when(k == pl.num_programs(1) - 1)
    def _():
        h = acc_ref[...] + b_ref[...]
        if apply_relu:
            h = jnp.maximum(h.astype(ew_dtype), 0.0)
        o_ref[...] = h.astype(o_ref.dtype)


# ----------------------------------------------------------------------------
# Parameter prep + wrapper
# ----------------------------------------------------------------------------
def prepare_params(weights, biases, compute_dtype=jnp.bfloat16):
    """One-time prep: transpose PyTorch (out,in) weights to (in,out) and
    zero-pad all feature dims to multiples of 128 lanes.

    Returns (params, in_dim, out_dim); params interleaves [w0_t, b0, w1_t, b1,...].
    Weights stored in the MXU compute dtype (bf16 default, all generations);
    biases stay f32 (added to the f32 accumulator)."""
    params = []
    for w, b in zip(weights, biases):
        w = jnp.asarray(w, jnp.float32)
        b = jnp.asarray(b, jnp.float32)
        out_d, in_d = w.shape
        in_p = _round_up(in_d, 128)
        out_p = _round_up(out_d, 128)
        w_t = jnp.zeros((in_p, out_p), jnp.float32).at[:in_d, :out_d].set(w.T)
        b_p = jnp.zeros((1, out_p), jnp.float32).at[:, :out_d].set(b.reshape(1, -1))
        params.append(w_t.astype(compute_dtype))
        params.append(b_p)
    return params, weights[0].shape[1], weights[-1].shape[0]


def classifier_mlp_forward(x, prepared, force_layerwise=False):
    """x: (batch, in_dim). prepared = prepare_params(...) output."""
    params, in_dim, out_dim = prepared
    num_layers = len(params) // 2
    compute_dtype = params[0].dtype
    ew_dtype = _elementwise_dtype(compute_dtype)
    itemsize = jnp.dtype(compute_dtype).itemsize
    batch = x.shape[0]
    in_pad = params[0].shape[0]
    out_pad = params[-2].shape[1]
    max_pad = max(int(p.shape[1]) for p in params[0::2])

    # --- batch tile selection (VMEM-budget checked, v7x-conservative) -------
    sub = 16 if itemsize == 2 else 8
    if batch >= 512:
        tile_b = 512
    elif batch >= 256:
        tile_b = 256
    else:
        tile_b = _round_up(max(batch, 1), sub)

    param_bytes = sum(int(p.size) * p.dtype.itemsize for p in params)

    def _act_bytes(tb):
        # double-buffered x & out tiles + rough f32 intermediate headroom
        return (2 * tb * in_pad * itemsize + 2 * tb * out_pad * itemsize
                + 2 * tb * max_pad * 4)

    PARAM_VMEM_BUDGET = 20 * 1024 * 1024   # fused path: all weights resident
    VMEM_BUDGET = 26 * 1024 * 1024         # vs v7x default 32 MiB scoped VMEM
    use_fused = (not force_layerwise) and param_bytes <= PARAM_VMEM_BUDGET
    resident = param_bytes if use_fused else 0
    while resident + _act_bytes(tile_b) > VMEM_BUDGET and tile_b > 2 * sub:
        tile_b = _round_up(tile_b // 2, sub)

    padded_batch = _round_up(batch, tile_b)
    num_tiles = padded_batch // tile_b

    # --- input: cast to compute dtype, pad only if needed -------------------
    # Padded feature columns hit zero weight rows (exact); padded batch rows
    # produce bias-only logits that are sliced off below.
    if batch == padded_batch and in_dim == in_pad:
        x_p = x.astype(compute_dtype)
    else:
        x_p = jnp.pad(x.astype(compute_dtype),
                      ((0, padded_batch - batch), (0, in_pad - in_dim)))

    if use_fused:
        flops = 2 * padded_batch * sum(
            int(params[2 * i].shape[0]) * int(params[2 * i].shape[1])
            for i in range(num_layers))
        cost = pl.CostEstimate(
            flops=flops, transcendentals=0,
            bytes_accessed=int(x_p.size) * itemsize + param_bytes
            + padded_batch * out_pad * itemsize)

        x_spec = pl.BlockSpec((tile_b, in_pad), lambda i: (i, 0))
        # Whole-array VMEM residency: single copy, no re-DMA, no double-buffer.
        param_specs = [pl.BlockSpec(memory_space=pltpu.MemorySpace.VMEM)
                       for _ in params]
        out_spec = pl.BlockSpec((tile_b, out_pad), lambda i: (i, 0))

        out_p = pl.pallas_call(
            functools.partial(_mlp_kernel, num_layers, ew_dtype),
            out_shape=jax.ShapeDtypeStruct((padded_batch, out_pad),
                                           compute_dtype),
            grid=(num_tiles,),
            in_specs=[x_spec] + param_specs,
            out_specs=out_spec,
            cost_estimate=cost,
            compiler_params=pltpu.CompilerParams(
                dimension_semantics=("parallel",)),   # megacore on v7x
        )(x_p, *params)
        return out_p[:batch, :out_dim].astype(jnp.float32)

    # --- fallback: per-layer K-tiled matmul with f32 accumulator ------------
    h = x_p
    for i in range(num_layers):
        w = params[2 * i]
        b = params[2 * i + 1]
        k_pad, o_pad = int(w.shape[0]), int(w.shape[1])
        ktile = _pick_ktile(k_pad)
        h = pl.pallas_call(
            functools.partial(_layer_ktiled_kernel, i < num_layers - 1,
                              ew_dtype),
            out_shape=jax.ShapeDtypeStruct((padded_batch, o_pad),
                                           compute_dtype),
            grid=(num_tiles, k_pad // ktile),
            in_specs=[
                pl.BlockSpec((tile_b, ktile), lambda ib, ik: (ib, ik)),
                pl.BlockSpec((ktile, o_pad), lambda ib, ik: (ik, 0)),
                pl.BlockSpec((1, o_pad), lambda ib, ik: (0, 0)),
            ],
            out_specs=pl.BlockSpec((tile_b, o_pad), lambda ib, ik: (ib, 0)),
            scratch_shapes=[pltpu.VMEM((tile_b, o_pad), jnp.float32)],
            compiler_params=pltpu.CompilerParams(
                dimension_semantics=("parallel", "arbitrary")),
        )(h, w, b)
    return h[:batch, :out_dim].astype(jnp.float32)


# ----------------------------------------------------------------------------
# Synthetic init / reference
# ----------------------------------------------------------------------------
def init_params(key, in_dim, hidden_dim, num_layers):
    """Deterministic synthetic init matching nn.Linear shapes (out, in)."""
    dims = []
    if num_layers == 1:
        dims.append((2, in_dim))
    else:
        dims.append((hidden_dim, in_dim))
        for _ in range(num_layers - 2):
            dims.append((hidden_dim, hidden_dim))
        dims.append((2, hidden_dim))

    weights, biases = [], []
    for (out_d, in_d) in dims:
        key, kw, kb = jax.random.split(key, 3)
        bound = 1.0 / jnp.sqrt(in_d)
        weights.append(
            jax.random.uniform(kw, (out_d, in_d), jnp.float32, -bound, bound))
        biases.append(
            jax.random.uniform(kb, (out_d,), jnp.float32, -bound, bound))
    return weights, biases


def reference_forward(x, weights, biases, num_layers):
    h = x
    for i in range(num_layers):
        h = h @ weights[i].T + biases[i]
        if i < num_layers - 1:
            h = jnp.maximum(h, 0.0)
    return h


if __name__ == "__main__":
    # Shapes consistent with the module: in_dim=32, hidden=32, num_layers=3,
    # dropout=0.1 (identity in eval mode).
    batch, in_dim, hidden_dim, num_layers = 8, 32, 32, 3

    key = jax.random.PRNGKey(0)
    key, kx = jax.random.split(key)
    x = jax.random.normal(kx, (batch, in_dim), jnp.float32)

    weights, biases = init_params(key, in_dim, hidden_dim, num_layers)
    ref = reference_forward(x, weights, biases, num_layers)

    # 1) f32 MXU-input path (tight correctness check).
    prep_f32 = prepare_params(weights, biases, compute_dtype=jnp.float32)
    out_f32 = jax.block_until_ready(classifier_mlp_forward(x, prep_f32))
    assert out_f32.shape == (batch, 2), out_f32.shape
    assert jnp.allclose(out_f32, ref, atol=1e-4, rtol=1e-4), (out_f32, ref)

    # 2) bf16 path (default; all generations, f32 accumulation) — loose check.
    prep_bf16 = prepare_params(weights, biases)
    out_bf16 = jax.block_until_ready(classifier_mlp_forward(x, prep_bf16))
    assert out_bf16.shape == (batch, 2), out_bf16.shape
    assert jnp.allclose(out_bf16, ref, atol=5e-2, rtol=5e-2), (out_bf16, ref)

    # 3) Layerwise K-tiled fallback (v7x large-hidden path), forced here.
    out_lw = jax.block_until_ready(
        classifier_mlp_forward(x, prep_bf16, force_layerwise=True))
    assert out_lw.shape == (batch, 2), out_lw.shape
    assert jnp.allclose(out_lw, ref, atol=5e-2, rtol=5e-2), (out_lw, ref)

    # 4) Multi-tile batch grid (2 batch tiles of 256, padded rows sliced off).
    key, kx2 = jax.random.split(key)
    x2 = jax.random.normal(kx2, (384, in_dim), jnp.float32)
    ref2 = reference_forward(x2, weights, biases, num_layers)
    out2 = jax.block_until_ready(classifier_mlp_forward(x2, prep_bf16))
    assert out2.shape == (384, 2), out2.shape
    assert jnp.allclose(out2, ref2, atol=5e-2, rtol=5e-2), (out2, ref2)

    print("KERNEL_OK")
</pallas_src>

<mosaic_0001>
module attributes {stable_mosaic.version = 11 : i64} {
  func.func @_mlp_kernel(%arg0: i32, %arg1: memref<8x128xf32, #tpu.memory_space<vmem>>, %arg2: memref<128x128xf32, #tpu.memory_space<vmem>>, %arg3: memref<1x128xf32, #tpu.memory_space<vmem>>, %arg4: memref<128x128xf32, #tpu.memory_space<vmem>>, %arg5: memref<1x128xf32, #tpu.memory_space<vmem>>, %arg6: memref<128x128xf32, #tpu.memory_space<vmem>>, %arg7: memref<1x128xf32, #tpu.memory_space<vmem>>, %arg8: memref<8x128xf32, #tpu.memory_space<vmem>>) attributes {dimension_semantics = [#tpu.dimension_semantics<parallel>], iteration_bounds = array<i64: 1>, scalar_prefetch = 0 : i64, scratch_operands = 0 : i64, tpu.core_type = #tpu.core_type<tc>, window_params = [{transform_indices = @transform_0, window_bounds = array<i64: 8, 128>}, {pipeline_mode = #tpu.pipeline_mode<synchronous>, transform_indices = @transform_1, window_bounds = array<i64: 128, 128>}, {pipeline_mode = #tpu.pipeline_mode<synchronous>, transform_indices = @transform_2, window_bounds = array<i64: 1, 128>}, {pipeline_mode = #tpu.pipeline_mode<synchronous>, transform_indices = @transform_3, window_bounds = array<i64: 128, 128>}, {pipeline_mode = #tpu.pipeline_mode<synchronous>, transform_indices = @transform_4, window_bounds = array<i64: 1, 128>}, {pipeline_mode = #tpu.pipeline_mode<synchronous>, transform_indices = @transform_5, window_bounds = array<i64: 128, 128>}, {pipeline_mode = #tpu.pipeline_mode<synchronous>, transform_indices = @transform_6, window_bounds = array<i64: 1, 128>}, {transform_indices = @transform_7, window_bounds = array<i64: 8, 128>}]} {
    %c0 = arith.constant 0 : index
    %c0_0 = arith.constant 0 : index
    %0 = vector.load %arg1[%c0, %c0_0] : memref<8x128xf32, #tpu.memory_space<vmem>>, vector<8x128xf32>
    %c0_1 = arith.constant 0 : index
    %c0_2 = arith.constant 0 : index
    %1 = vector.load %arg3[%c0_1, %c0_2] : memref<1x128xf32, #tpu.memory_space<vmem>>, vector<1x128xf32>
    %c0_3 = arith.constant 0 : index
    %c0_4 = arith.constant 0 : index
    %2 = vector.load %arg2[%c0_3, %c0_4] : memref<128x128xf32, #tpu.memory_space<vmem>>, vector<128x128xf32>
    %cst = arith.constant dense<0.000000e+00> : vector<8x128xf32>
    %3 = tpu.matmul %0, %2, %cst {dimension_numbers = #tpu.dot_dimension_numbers<[1], [0], [0], [1], [0, 0, 1, 1], [], []>} : vector<8x128xf32>, vector<128x128xf32>, vector<8x128xf32> -> vector<8x128xf32>
    %4 = vector.broadcast %1 : vector<1x128xf32> to vector<8x128xf32>
    %5 = arith.addf %3, %4 : vector<8x128xf32>
    %cst_5 = arith.constant 0.000000e+00 : f32
    %6 = vector.broadcast %cst_5 : f32 to vector<8x128xf32>
    %7 = arith.maximumf %5, %6 : vector<8x128xf32>
    %c0_6 = arith.constant 0 : index
    %c0_7 = arith.constant 0 : index
    %8 = vector.load %arg5[%c0_6, %c0_7] : memref<1x128xf32, #tpu.memory_space<vmem>>, vector<1x128xf32>
    %c0_8 = arith.constant 0 : index
    %c0_9 = arith.constant 0 : index
    %9 = vector.load %arg4[%c0_8, %c0_9] : memref<128x128xf32, #tpu.memory_space<vmem>>, vector<128x128xf32>
    %cst_10 = arith.constant dense<0.000000e+00> : vector<8x128xf32>
    %10 = tpu.matmul %7, %9, %cst_10 {dimension_numbers = #tpu.dot_dimension_numbers<[1], [0], [0], [1], [0, 0, 1, 1], [], []>} : vector<8x128xf32>, vector<128x128xf32>, vector<8x128xf32> -> vector<8x128xf32>
    %11 = vector.broadcast %8 : vector<1x128xf32> to vector<8x128xf32>
    %12 = arith.addf %10, %11 : vector<8x128xf32>
    %cst_11 = arith.constant 0.000000e+00 : f32
    %13 = vector.broadcast %cst_11 : f32 to vector<8x128xf32>
    %14 = arith.maximumf %12, %13 : vector<8x128xf32>
    %c0_12 = arith.constant 0 : index
    %c0_13 = arith.constant 0 : index
    %15 = vector.load %arg7[%c0_12, %c0_13] : memref<1x128xf32, #tpu.memory_space<vmem>>, vector<1x128xf32>
    %c0_14 = arith.constant 0 : index
    %c0_15 = arith.constant 0 : index
    %16 = vector.load %arg6[%c0_14, %c0_15] : memref<128x128xf32, #tpu.memory_space<vmem>>, vector<128x128xf32>
    %cst_16 = arith.constant dense<0.000000e+00> : vector<8x128xf32>
    %17 = tpu.matmul %14, %16, %cst_16 {dimension_numbers = #tpu.dot_dimension_numbers<[1], [0], [0], [1], [0, 0, 1, 1], [], []>} : vector<8x128xf32>, vector<128x128xf32>, vector<8x128xf32> -> vector<8x128xf32>
    %18 = vector.broadcast %15 : vector<1x128xf32> to vector<8x128xf32>
    %19 = arith.addf %17, %18 : vector<8x128xf32>
    %c0_17 = arith.constant 0 : index
    %c0_18 = arith.constant 0 : index
    %20 = vector.load %arg8[%c0_17, %c0_18] : memref<8x128xf32, #tpu.memory_space<vmem>>, vector<8x128xf32>
    tpu.vector_store %arg8[%c0_17, %c0_18], %19 {strides = array<i32>} : memref<8x128xf32, #tpu.memory_space<vmem>>, vector<8x128xf32>,
    return
  }
  func.func @transform_0(%arg0: i32) -> (i32, i32) {
    %c0_i32 = arith.constant 0 : i32
    %c0_i32_0 = arith.constant 0 : i32
    return %arg0, %c0_i32 : i32, i32
  }
  func.func @transform_1(%arg0: i32) -> (i32, i32) {
    %c0_i32 = arith.constant 0 : i32
    %c0_i32_0 = arith.constant 0 : i32
    %c0_i32_1 = arith.constant 0 : i32
    return %c0_i32, %c0_i32_0 : i32, i32
  }
  func.func @transform_2(%arg0: i32) -> (i32, i32) {
    %c0_i32 = arith.constant 0 : i32
    %c0_i32_0 = arith.constant 0 : i32
    %c0_i32_1 = arith.constant 0 : i32
    return %c0_i32, %c0_i32_0 : i32, i32
  }
  func.func @transform_3(%arg0: i32) -> (i32, i32) {
    %c0_i32 = arith.constant 0 : i32
    %c0_i32_0 = arith.constant 0 : i32
    %c0_i32_1 = arith.constant 0 : i32
    return %c0_i32, %c0_i32_0 : i32, i32
  }
  func.func @transform_4(%arg0: i32) -> (i32, i32) {
    %c0_i32 = arith.constant 0 : i32
    %c0_i32_0 = arith.constant 0 : i32
    %c0_i32_1 = arith.constant 0 : i32
    return %c0_i32, %c0_i32_0 : i32, i32
  }
  func.func @transform_5(%arg0: i32) -> (i32, i32) {
    %c0_i32 = arith.constant 0 : i32
    %c0_i32_0 = arith.constant 0 : i32
    %c0_i32_1 = arith.constant 0 : i32
    return %c0_i32, %c0_i32_0 : i32, i32
  }
  func.func @transform_6(%arg0: i32) -> (i32, i32) {
    %c0_i32 = arith.constant 0 : i32
    %c0_i32_0 = arith.constant 0 : i32
    %c0_i32_1 = arith.constant 0 : i32
    return %c0_i32, %c0_i32_0 : i32, i32
  }
  func.func @transform_7(%arg0: i32) -> (i32, i32) {
    %c0_i32 = arith.constant 0 : i32
    %c0_i32_0 = arith.constant 0 : i32
    return %arg0, %c0_i32 : i32, i32
  }
}

</mosaic_0001>

<llo_original>
// kernel: tpu_custom_call.1
$region0: #{tpu_custom_call.1}
  #allocation0 [shape = 'u32[]', space=smem, size = 0x4, offset = 0x4, fixed_abs, tag = 'smem constant byte address 0x4 - core index']
  #allocation1 [shape = 'u32[72,128]{1,0:T(1,128)}', space=vmem, size = 0x9000, scoped, tag = 'internal scratch']
  %s0 = inlined_call_operand.hbm [shape: f32[8,128], index: 0, kind: input, shape index: {}]
  %s1 = inlined_call_operand.hbm [shape: f32[128,128], index: 1, kind: input, shape index: {}]
  %s2 = inlined_call_operand.vmem [shape: f32[1,128], index: 2, kind: input, shape index: {}]
  %s3 = inlined_call_operand.hbm [shape: f32[128,128], index: 3, kind: input, shape index: {}]
  %s4 = inlined_call_operand.vmem [shape: f32[1,128], index: 4, kind: input, shape index: {}]
  %s5 = inlined_call_operand.hbm [shape: f32[128,128], index: 5, kind: input, shape index: {}]
  %s6 = inlined_call_operand.vmem [shape: f32[1,128], index: 6, kind: input, shape index: {}]
  %s7 = inlined_call_operand.hbm [shape: f32[8,128], index: 7, kind: output, shape index: {}]
  %s8 = sld [smem:[#allocation0]]
  $region54: #{tpu_custom_call.1} parent=0
    _
  %s10 = ssub.s32 1, %s8
  %s11 = scalar_select 0, %s10, %s8
  $region1: #{tpu_custom_call.1} parent=0
    #allocation2 [shape = 'u8[4096]{0}', space=vmem, size = 0x1000, scoped, tag = 'input window, operand 0, single buffered']
    #allocation3 [shape = 's32[1]{0}', space=sflag, size = 0x4, scoped, tag = 'scoped memory for tpu_custom_call.1']
    #allocation4 [shape = 's32[1]{0}', space=sflag, size = 0x4, scoped, tag = 'scoped memory for tpu_custom_call.1']
    #allocation5 [shape = 'u8[65536]{0}', space=vmem, size = 0x10000, scoped, tag = 'input window, operand 1, single buffered']
    #allocation6 [shape = 's32[1]{0}', space=sflag, size = 0x4, scoped, tag = 'scoped memory for tpu_custom_call.1']
    #allocation7 [shape = 'u8[65536]{0}', space=vmem, size = 0x10000, scoped, tag = 'input window, operand 3, single buffered']
    #allocation8 [shape = 'u8[65536]{0}', space=vmem, size = 0x10000, scoped, tag = 'input window, operand 5, single buffered']
    #allocation9 [shape = 's32[1]{0}', space=sflag, size = 0x4, scoped, tag = 'scoped memory for tpu_custom_call.1']
    #allocation10 [shape = 'u8[4096]{0}', space=vmem, size = 0x1000, scoped, tag = 'output window, operand 0, single buffered']
    %12 = vsyncpa [#allocation3], 0
    %13 = vsyncpa [#allocation6], 0
    %14 = vsyncpa [#allocation9], 0
    %15 = vsyncpa [#allocation4], 0
    // Predicated region
    $region2: #{tpu_custom_call.1} parent=1 // pred_check
      _
    $region3: #{tpu_custom_call.1} parent=1 // pred_check_branch
      %17 = sbr.rel (0) target = $region5
    $region4: #{tpu_custom_call.1} parent=1 // pred_region
      %19 = vsyncadd [#allocation3], 0
      %s21 = sshll.u32 %s0, 4
      %s22 = int_to_ptr.hbm [resolvable:$true] %s21
      %s23 = sshll.u32 [#allocation2], 4
      %s24 = int_to_ptr.vmem [resolvable:$true] %s23
      %26 = dma.hbm_to_vmem [thread:$0]  %s22, 128, %s24, [#allocation3]
    $region5: #{tpu_custom_call.1} parent=1 // pred_fallthru
      _
    // Predicated region
    $region6: #{tpu_custom_call.1} parent=1 // pred_check
      _
    $region7: #{tpu_custom_call.1} parent=1 // pred_check_branch
      %28 = sbr.rel (0) target = $region9
    $region8: #{tpu_custom_call.1} parent=1 // pred_region
      %30 = vsyncadd [#allocation6], 0
      %s31 = sshll.u32 %s1, 4
      %s32 = int_to_ptr.hbm [resolvable:$true] %s31
      %s33 = sshll.u32 [#allocation5], 4
      %s34 = int_to_ptr.vmem [resolvable:$true] %s33
      %39 = dma.hbm_to_vmem [thread:$0]  %s32, 2048, %s34, [#allocation6], 128, 128, 8
    $region9: #{tpu_custom_call.1} parent=1 // pred_fallthru
      _
    // Predicated region
    $region10: #{tpu_custom_call.1} parent=1 // pred_check
      _
    $region11: #{tpu_custom_call.1} parent=1 // pred_check_branch
      %41 = sbr.rel (0) target = $region13
    $region12: #{tpu_custom_call.1} parent=1 // pred_region
      _
    $region13: #{tpu_custom_call.1} parent=1 // pred_fallthru
      _
    // Predicated region
    $region14: #{tpu_custom_call.1} parent=1 // pred_check
      _
    $region15: #{tpu_custom_call.1} parent=1 // pred_check_branch
      %43 = sbr.rel (0) target = $region17
    $region16: #{tpu_custom_call.1} parent=1 // pred_region
      %45 = vsyncadd [#allocation6], 0
      %s46 = sshll.u32 %s3, 4
      %s47 = int_to_ptr.hbm [resolvable:$true] %s46
      %s48 = sshll.u32 [#allocation7], 4
      %s49 = int_to_ptr.vmem [resolvable:$true] %s48
      %54 = dma.hbm_to_vmem [thread:$0]  %s47, 2048, %s49, [#allocation6], 128, 128, 8
    $region17: #{tpu_custom_call.1} parent=1 // pred_fallthru
      _
    // Predicated region
    $region18: #{tpu_custom_call.1} parent=1 // pred_check
      _
    $region19: #{tpu_custom_call.1} parent=1 // pred_check_branch
      %56 = sbr.rel (0) target = $region21
    $region20: #{tpu_custom_call.1} parent=1 // pred_region
      _
    $region21: #{tpu_custom_call.1} parent=1 // pred_fallthru
      _
    // Predicated region
    $region22: #{tpu_custom_call.1} parent=1 // pred_check
      _
    $region23: #{tpu_custom_call.1} parent=1 // pred_check_branch
      %58 = sbr.rel (0) target = $region25
    $region24: #{tpu_custom_call.1} parent=1 // pred_region
      %60 = vsyncadd [#allocation9], 0
      %s61 = sshll.u32 %s5, 4
      %s62 = int_to_ptr.hbm [resolvable:$true] %s61
      %s63 = sshll.u32 [#allocation8], 4
      %s64 = int_to_ptr.vmem [resolvable:$true] %s63
      %69 = dma.hbm_to_vmem [thread:$0]  %s62, 2048, %s64, [#allocation9], 128, 128, 8
    $region25: #{tpu_custom_call.1} parent=1 // pred_fallthru
      _
    // Predicated region
    $region26: #{tpu_custom_call.1} parent=1 // pred_check
      _
    $region27: #{tpu_custom_call.1} parent=1 // pred_check_branch
      %71 = sbr.rel (0) target = $region29
    $region28: #{tpu_custom_call.1} parent=1 // pred_region
      _
    $region29: #{tpu_custom_call.1} parent=1 // pred_fallthru
      _
    // Predicated region
    $region30: #{tpu_custom_call.1} parent=1 // pred_check
      _
    $region31: #{tpu_custom_call.1} parent=1 // pred_check_branch
      %73 = sbr.rel (0) target = $region33
    $region32: #{tpu_custom_call.1} parent=1 // pred_region
      %75 = dma.done [#allocation3], 128
    $region33: #{tpu_custom_call.1} parent=1 // pred_fallthru
      _
    // Predicated region
    $region34: #{tpu_custom_call.1} parent=1 // pred_check
      _
    $region35: #{tpu_custom_call.1} parent=1 // pred_check_branch
      %77 = sbr.rel (0) target = $region37
    $region36: #{tpu_custom_call.1} parent=1 // pred_region
      %79 = dma.done [#allocation6], 2048
    $region37: #{tpu_custom_call.1} parent=1 // pred_fallthru
      _
    // Predicated region
    $region38: #{tpu_custom_call.1} parent=1 // pred_check
      _
    $region39: #{tpu_custom_call.1} parent=1 // pred_check_branch
      %81 = sbr.rel (0) target = $region41
    $region40: #{tpu_custom_call.1} parent=1 // pred_region
      %83 = dma.done [#allocation6], 2048
    $region41: #{tpu_custom_call.1} parent=1 // pred_fallthru
      _
    // Predicated region
    $region42: #{tpu_custom_call.1} parent=1 // pred_check
      _
    $region43: #{tpu_custom_call.1} parent=1 // pred_check_branch
      %85 = sbr.rel (0) target = $region45
    $region44: #{tpu_custom_call.1} parent=1 // pred_region
      %87 = dma.done [#allocation9], 2048
    $region45: #{tpu_custom_call.1} parent=1 // pred_fallthru
      _
    %v88 = vld [vmem:[#allocation2] sm:$0xff]
    %v89 = vld [vmem:[%s2] sm:$0x1]
    %v90 = vld [vmem:[#allocation5] sm:$0xff]
    %v91 = vld [vmem:[#allocation5 + $0x8] sm:$0xff]
    %v92 = vld [vmem:[#allocation5 + $0x10] sm:$0xff]
    %v93 = vld [vmem:[#allocation5 + $0x18] sm:$0xff]
    %v94 = vld [vmem:[#allocation5 + $0x20] sm:$0xff]
    %v95 = vld [vmem:[#allocation5 + $0x28] sm:$0xff]
    %v96 = vld [vmem:[#allocation5 + $0x30] sm:$0xff]
    %v97 = vld [vmem:[#allocation5 + $0x38] sm:$0xff]
    %v98 = vld [vmem:[#allocation5 + $0x40] sm:$0xff]
    %v99 = vld [vmem:[#allocation5 + $0x48] sm:$0xff]
    %v100 = vld [vmem:[#allocation5 + $0x50] sm:$0xff]
    %v101 = vld [vmem:[#allocation5 + $0x58] sm:$0xff]
    %v102 = vld [vmem:[#allocation5 + $0x60] sm:$0xff]
    %v103 = vld [vmem:[#allocation5 + $0x68] sm:$0xff]
    %v104 = vld [vmem:[#allocation5 + $0x70] sm:$0xff]
    %v105 = vld [vmem:[#allocation5 + $0x78] sm:$0xff]
    %v107 = vperm.slane %v89, 0
    %109 = vmatpush.msra.mxu0 %v105
    %110 = vmatpush.msra.mxu0 %v104
    %111 = vmatpush.msra.mxu0 %v103
    %112 = vmatpush.msra.mxu0 %v102
    %113 = vmatpush.msra.mxu0 %v101
    %114 = vmatpush.msra.mxu0 %v100
    %115 = vmatpush.msra.mxu0 %v99
    %116 = vmatpush.msra.mxu0 %v98
    %117 = vmatpush.msra.mxu0 %v97
    %118 = vmatpush.msra.mxu0 %v96
    %119 = vmatpush.msra.mxu0 %v95
    %120 = vmatpush.msra.mxu0 %v94
    %121 = vmatpush.msra.mxu0 %v93
    %122 = vmatpush.msra.mxu0 %v92
    %123 = vmatpush.msra.mxu0 %v91
    %124 = vmatpush.msra.mxu0 %v90
    %125 = vmatmul.f32.gmra.mxu0 %v88
    %v126 = vpop.f32.mrf.mxu0
    %v127 = vadd.f32 %v107, %v126
    %128 = vdwg.mxu0
    %v129 = vmax.f32 %v127, 0.0
    %v130 = vld [vmem:[%s4] sm:$0x1]
    %v131 = vld [vmem:[#allocation7] sm:$0xff]
    %v132 = vld [vmem:[#allocation7 + $0x8] sm:$0xff]
    %v133 = vld [vmem:[#allocation7 + $0x10] sm:$0xff]
    %v134 = vld [vmem:[#allocation7 + $0x18] sm:$0xff]
    %v135 = vld [vmem:[#allocation7 + $0x20] sm:$0xff]
    %v136 = vld [vmem:[#allocation7 + $0x28] sm:$0xff]
    %v137 = vld [vmem:[#allocation7 + $0x30] sm:$0xff]
    %v138 = vld [vmem:[#allocation7 + $0x38] sm:$0xff]
    %v139 = vld [vmem:[#allocation7 + $0x40] sm:$0xff]
    %v140 = vld [vmem:[#allocation7 + $0x48] sm:$0xff]
    %v141 = vld [vmem:[#allocation7 + $0x50] sm:$0xff]
    %v142 = vld [vmem:[#allocation7 + $0x58] sm:$0xff]
    %v143 = vld [vmem:[#allocation7 + $0x60] sm:$0xff]
    %v144 = vld [vmem:[#allocation7 + $0x68] sm:$0xff]
    %v145 = vld [vmem:[#allocation7 + $0x70] sm:$0xff]
    %v146 = vld [vmem:[#allocation7 + $0x78] sm:$0xff]
    %v148 = vperm.slane %v130, 0
    %150 = vmatpush.msra.mxu0 %v146
    %151 = vmatpush.msra.mxu0 %v145
    %152 = vmatpush.msra.mxu0 %v144
    %153 = vmatpush.msra.mxu0 %v143
    %154 = vmatpush.msra.mxu0 %v142
    %155 = vmatpush.msra.mxu0 %v141
    %156 = vmatpush.msra.mxu0 %v140
    %157 = vmatpush.msra.mxu0 %v139
    %158 = vmatpush.msra.mxu0 %v138
    %159 = vmatpush.msra.mxu0 %v137
    %160 = vmatpush.msra.mxu0 %v136
    %161 = vmatpush.msra.mxu0 %v135
    %162 = vmatpush.msra.mxu0 %v134
    %163 = vmatpush.msra.mxu0 %v133
    %164 = vmatpush.msra.mxu0 %v132
    %165 = vmatpush.msra.mxu0 %v131
    %166 = vmatmul.f32.gmra.mxu0 %v129
    %v167 = vpop.f32.mrf.mxu0
    %v168 = vadd.f32 %v148, %v167
    %169 = vdwg.mxu0
    %v170 = vmax.f32 %v168, 0.0
    %v171 = vld [vmem:[%s6] sm:$0x1]
    %v172 = vld [vmem:[#allocation8] sm:$0xff]
    %v173 = vld [vmem:[#allocation8 + $0x8] sm:$0xff]
    %v174 = vld [vmem:[#allocation8 + $0x10] sm:$0xff]
    %v175 = vld [vmem:[#allocation8 + $0x18] sm:$0xff]
    %v176 = vld [vmem:[#allocation8 + $0x20] sm:$0xff]
    %v177 = vld [vmem:[#allocation8 + $0x28] sm:$0xff]
    %v178 = vld [vmem:[#allocation8 + $0x30] sm:$0xff]
    %v179 = vld [vmem:[#allocation8 + $0x38] sm:$0xff]
    %v180 = vld [vmem:[#allocation8 + $0x40] sm:$0xff]
    %v181 = vld [vmem:[#allocation8 + $0x48] sm:$0xff]
    %v182 = vld [vmem:[#allocation8 + $0x50] sm:$0xff]
    %v183 = vld [vmem:[#allocation8 + $0x58] sm:$0xff]
    %v184 = vld [vmem:[#allocation8 + $0x60] sm:$0xff]
    %v185 = vld [vmem:[#allocation8 + $0x68] sm:$0xff]
    %v186 = vld [vmem:[#allocation8 + $0x70] sm:$0xff]
    %v187 = vld [vmem:[#allocation8 + $0x78] sm:$0xff]
    %v189 = vperm.slane %v171, 0
    %191 = vmatpush.msra.mxu0 %v187
    %192 = vmatpush.msra.mxu0 %v186
    %193 = vmatpush.msra.mxu0 %v185
    %194 = vmatpush.msra.mxu0 %v184
    %195 = vmatpush.msra.mxu0 %v183
    %196 = vmatpush.msra.mxu0 %v182
    %197 = vmatpush.msra.mxu0 %v181
    %198 = vmatpush.msra.mxu0 %v180
    %199 = vmatpush.msra.mxu0 %v179
    %200 = vmatpush.msra.mxu0 %v178
    %201 = vmatpush.msra.mxu0 %v177
    %202 = vmatpush.msra.mxu0 %v176
    %203 = vmatpush.msra.mxu0 %v175
    %204 = vmatpush.msra.mxu0 %v174
    %205 = vmatpush.msra.mxu0 %v173
    %206 = vmatpush.msra.mxu0 %v172
    %207 = vmatmul.f32.gmra.mxu0 %v170
    %v208 = vpop.f32.mrf.mxu0
    %v209 = vadd.f32 %v189, %v208
    %210 = vdwg.mxu0
    %211 = vst [vmem:[#allocation10] sm:$0xff] %v209
    // Predicated region
    $region46: #{tpu_custom_call.1} parent=1 // pred_check
      _
    $region47: #{tpu_custom_call.1} parent=1 // pred_check_branch
      %213 = sbr.rel (0) target = $region49
    $region48: #{tpu_custom_call.1} parent=1 // pred_region
      %215 = vsyncadd [#allocation4], 0
      %s217 = sshll.u32 [#allocation10], 4
      %s218 = int_to_ptr.vmem [resolvable:$true] %s217
      %s219 = sshll.u32 %s7, 4
      %s220 = int_to_ptr.hbm [resolvable:$true] %s219
      %222 = dma.vmem_to_hbm [thread:$0]  %s218, 128, %s220, [#allocation4]
    $region49: #{tpu_custom_call.1} parent=1 // pred_fallthru
      _
    // Predicated region
    $region50: #{tpu_custom_call.1} parent=1 // pred_check
      _
    $region51: #{tpu_custom_call.1} parent=1 // pred_check_branch
      %224 = sbr.rel (0) target = $region53
    $region52: #{tpu_custom_call.1} parent=1 // pred_region
      %226 = dma.done [#allocation4], 128
    $region53: #{tpu_custom_call.1} parent=1 // pred_fallthru
      _
    %227 = vsyncpa [#allocation3], 1
    %228 = vsyncpa [#allocation6], 1
    %229 = vsyncpa [#allocation9], 1
    %230 = vsyncpa [#allocation4], 1

</llo_original>
